<compile_context>
chip_gen: v6e
topology: v6e:2x2x1
jax: 0.10.0
libtpu: 0.0.40
codegen_flags: <defaults>
</compile_context>

<pallas_src>
import jax
import jax.numpy as jnp
from jax.experimental import pallas as pl
from jax.experimental.pallas import tpu as pltpu


# Arrays at or below this size are copied as a single full-array VMEM block
# (no grid, no per-step pipeline overhead).  4 MiB double-buffered in+out is
# comfortably inside even v7x's 64 MiB VMEM.
_FULL_BLOCK_LIMIT_BYTES = 4 * 1024 * 1024

_LANE = 128
# Row-tile candidates for the large-array path (largest first).  2048 rows of
# f32 x 128 lanes = 1 MiB per block -> ~85%+ of HBM roofline while staying
# well under the v7x VMEM budget even with double buffering of in + out.
_TILE_ROW_CANDIDATES = (2048, 1024, 512, 256, 128, 64, 32, 16, 8)


def _identity_kernel(x_ref, o_ref):
    # Whole-tile copy: load the VMEM block and store it unchanged.
    o_ref[...] = x_ref[...]


def _identity_copy_full(x):
    """Single-block identity copy: whole array in VMEM, output aliases input."""
    return pl.pallas_call(
        _identity_kernel,
        out_shape=jax.ShapeDtypeStruct(x.shape, x.dtype),
        in_specs=[pl.BlockSpec(memory_space=pltpu.MemorySpace.VMEM)],
        out_specs=pl.BlockSpec(memory_space=pltpu.MemorySpace.VMEM),
        input_output_aliases={0: 0},
        compiler_params=pltpu.CompilerParams(
            vmem_limit_bytes=32 * 1024 * 1024,
        ),
    )(x)


def _identity_copy_tiled(x2d, tile_rows):
    """Tiled identity copy over a (R, 128) lane-dense slab, output aliases input."""
    R, C = x2d.shape
    assert R % tile_rows == 0 and C == _LANE
    grid = (R // tile_rows,)
    return pl.pallas_call(
        _identity_kernel,
        out_shape=jax.ShapeDtypeStruct((R, C), x2d.dtype),
        grid_spec=pltpu.PrefetchScalarGridSpec(
            num_scalar_prefetch=0,
            grid=grid,
            in_specs=[pl.BlockSpec((tile_rows, C), lambda i: (i, 0))],
            out_specs=pl.BlockSpec((tile_rows, C), lambda i: (i, 0)),
        ),
        input_output_aliases={0: 0},
        compiler_params=pltpu.CompilerParams(
            # 'parallel' lets v7x's two TensorCores each drive their share of
            # HBM bandwidth; it is a no-op on single-TC v5e/v6e.
            dimension_semantics=("parallel",),
            # Explicit VMEM budget sized for v7x's 64 MiB physical VMEM.
            vmem_limit_bytes=32 * 1024 * 1024,
        ),
    )(x2d)


def _pick_tile_rows(rows):
    for t in _TILE_ROW_CANDIDATES:
        if rows % t == 0:
            return t
    return None


class VMUNetPallas:
    """JAX/Pallas port of VMUNet. No parameters (the PyTorch __init__ defines none)."""

    def __init__(self):
        # The reference module has no parameters and init_weights() is a no-op.
        pass

    def __call__(self, x):
        nbytes = x.size * x.dtype.itemsize

        # Small inputs: one full-array block, no grid, no reshape plumbing.
        if nbytes <= _FULL_BLOCK_LIMIT_BYTES:
            return _identity_copy_full(x)

        # Large inputs: lane-dense tiled copy with ~1 MiB blocks.
        if x.size % _LANE == 0:
            rows = x.size // _LANE
            tile_rows = _pick_tile_rows(rows)
            if tile_rows is not None:
                # reshape of a contiguous row-major array is free (no copy).
                x2d = x.reshape(rows, _LANE)
                y2d = _identity_copy_tiled(x2d, tile_rows)
                return y2d.reshape(x.shape)

        # Last resort (ragged large input): minimal pad to a (8, 128) chunk,
        # tiled copy, then slice back.  Only reached for awkward sizes.
        chunk = 8 * _LANE
        total = x.size
        padded = ((total + chunk - 1) // chunk) * chunk
        flat = jnp.pad(x.reshape(-1), (0, padded - total))
        rows = padded // _LANE
        tile_rows = _pick_tile_rows(rows) or 8
        y2d = _identity_copy_tiled(flat.reshape(rows, _LANE), tile_rows)
        return y2d.reshape(-1)[:total].reshape(x.shape)


if __name__ == "__main__":
    key = jax.random.PRNGKey(0)
    # Small NCHW input consistent with an image-segmentation net's forward.
    x = jax.random.normal(key, (2, 4, 16, 16), dtype=jnp.float32)

    model = VMUNetPallas()
    y = model(x)
    y = jax.block_until_ready(y)

    # Forward is identity: verify exact match.
    assert y.shape == x.shape
    assert y.dtype == x.dtype
    assert bool(jnp.all(y == x))

    print("KERNEL_OK")
</pallas_src>

<mosaic_0001>
module attributes {stable_mosaic.version = 11 : i64} {
  func.func @_identity_kernel(%arg0: memref<2x4x16x16xf32, #tpu.memory_space<vmem>>, %arg1: memref<2x4x16x16xf32, #tpu.memory_space<vmem>>) attributes {dimension_semantics = [], scalar_prefetch = 0 : i64, scratch_operands = 0 : i64, tpu.core_type = #tpu.core_type<tc>} {
    %c0 = arith.constant 0 : index
    %c0_0 = arith.constant 0 : index
    %c0_1 = arith.constant 0 : index
    %c0_2 = arith.constant 0 : index
    %0 = vector.load %arg0[%c0, %c0_0, %c0_1, %c0_2] : memref<2x4x16x16xf32, #tpu.memory_space<vmem>>, vector<2x4x16x16xf32>
    %c0_3 = arith.constant 0 : index
    %c0_4 = arith.constant 0 : index
    %c0_5 = arith.constant 0 : index
    %c0_6 = arith.constant 0 : index
    %1 = vector.load %arg1[%c0_3, %c0_4, %c0_5, %c0_6] : memref<2x4x16x16xf32, #tpu.memory_space<vmem>>, vector<2x4x16x16xf32>
    tpu.vector_store %arg1[%c0_3, %c0_4, %c0_5, %c0_6], %0 {strides = array<i32>} : memref<2x4x16x16xf32, #tpu.memory_space<vmem>>, vector<2x4x16x16xf32>,
    return
  }
}

</mosaic_0001>

<llo_original>
// kernel: tpu_custom_call.1
$region0: #{tpu_custom_call.1}
  #allocation0 [shape = 'u32[]', space=smem, size = 0x4, offset = 0x4, fixed_abs, tag = 'smem constant byte address 0x4 - core index']
  #allocation1 [shape = 'u32[144,128]{1,0:T(1,128)}', space=vmem, size = 0x12000, scoped, tag = 'internal scratch']
  %s0 = inlined_call_operand.hbm [shape: f32[2,4,16,16], index: 0, kind: input, shape index: {}, may-alias: {0,1}]
  %s1 = inlined_call_operand.hbm [shape: f32[2,4,16,16], index: 1, kind: output, shape index: {}, may-alias: {0,1}]
  %s2 = sld [smem:[#allocation0]]
  $region18: #{tpu_custom_call.1} parent=0
    _
  %s4 = ssub.s32 1, %s2
  %s5 = scalar_select 0, %s4, %s2
  $region1: #{tpu_custom_call.1} parent=0
    #allocation2 [shape = 'u8[65536]{0}', space=vmem, size = 0x10000, scoped, tag = 'input window, operand 0, single buffered']
    #allocation3 [shape = 's32[1]{0}', space=sflag, size = 0x4, scoped, tag = 'scoped memory for tpu_custom_call.1']
    #allocation4 [shape = 's32[1]{0}', space=sflag, size = 0x4, scoped, tag = 'scoped memory for tpu_custom_call.1']
    #allocation5 [shape = 'u8[65536]{0}', space=vmem, size = 0x10000, scoped, tag = 'output window, operand 0, single buffered']
    %6 = vsyncpa [#allocation3], 0
    %7 = vsyncpa [#allocation4], 0
    // Predicated region
    $region2: #{tpu_custom_call.1} parent=1 // pred_check
      _
    $region3: #{tpu_custom_call.1} parent=1 // pred_check_branch
      %9 = sbr.rel (0) target = $region5
    $region4: #{tpu_custom_call.1} parent=1 // pred_region
      %s11 = ssub.s32 2048, 2048
      %12 = vsyncadd [#allocation3], %s11
      %s13 = sshll.u32 [#allocation2], 4
      %s14 = int_to_ptr.vmem [resolvable:$true] %s13
      %19 = dma.hbm_to_vmem [thread:$0]  %s0, 2048, %s14, [#allocation3], 128, 128, 8
    $region5: #{tpu_custom_call.1} parent=1 // pred_fallthru
      _
    // Predicated region
    $region6: #{tpu_custom_call.1} parent=1 // pred_check
      _
    $region7: #{tpu_custom_call.1} parent=1 // pred_check_branch
      %21 = sbr.rel (0) target = $region9
    $region8: #{tpu_custom_call.1} parent=1 // pred_region
      %22 = dma.done [#allocation3], 2048
    $region9: #{tpu_custom_call.1} parent=1 // pred_fallthru
      _
    %v23 = vld [vmem:[#allocation2] sm:$0xff]
    %v24 = vld [vmem:[#allocation2 + $0x8] sm:$0xff]
    %v25 = vld [vmem:[#allocation2 + $0x10] sm:$0xff]
    %v26 = vld [vmem:[#allocation2 + $0x18] sm:$0xff]
    %v27 = vld [vmem:[#allocation2 + $0x20] sm:$0xff]
    %v28 = vld [vmem:[#allocation2 + $0x28] sm:$0xff]
    %v29 = vld [vmem:[#allocation2 + $0x30] sm:$0xff]
    %v30 = vld [vmem:[#allocation2 + $0x38] sm:$0xff]
    %v31 = vld [vmem:[#allocation2 + $0x40] sm:$0xff]
    %v32 = vld [vmem:[#allocation2 + $0x48] sm:$0xff]
    %v33 = vld [vmem:[#allocation2 + $0x50] sm:$0xff]
    %v34 = vld [vmem:[#allocation2 + $0x58] sm:$0xff]
    %v35 = vld [vmem:[#allocation2 + $0x60] sm:$0xff]
    %v36 = vld [vmem:[#allocation2 + $0x68] sm:$0xff]
    %v37 = vld [vmem:[#allocation2 + $0x70] sm:$0xff]
    %v38 = vld [vmem:[#allocation2 + $0x78] sm:$0xff]
    %vm39 = vcmask 130048
    %40 = vst.msk [vmem:[#allocation5] sm:$0xff] %vm39, %v23
    %41 = vst.msk [vmem:[#allocation5 + $0x8] sm:$0xff] %vm39, %v24
    %42 = vst.msk [vmem:[#allocation5 + $0x10] sm:$0xff] %vm39, %v25
    %43 = vst.msk [vmem:[#allocation5 + $0x18] sm:$0xff] %vm39, %v26
    %44 = vst.msk [vmem:[#allocation5 + $0x20] sm:$0xff] %vm39, %v27
    %45 = vst.msk [vmem:[#allocation5 + $0x28] sm:$0xff] %vm39, %v28
    %46 = vst.msk [vmem:[#allocation5 + $0x30] sm:$0xff] %vm39, %v29
    %47 = vst.msk [vmem:[#allocation5 + $0x38] sm:$0xff] %vm39, %v30
    %48 = vst.msk [vmem:[#allocation5 + $0x40] sm:$0xff] %vm39, %v31
    %49 = vst.msk [vmem:[#allocation5 + $0x48] sm:$0xff] %vm39, %v32
    %50 = vst.msk [vmem:[#allocation5 + $0x50] sm:$0xff] %vm39, %v33
    %51 = vst.msk [vmem:[#allocation5 + $0x58] sm:$0xff] %vm39, %v34
    %52 = vst.msk [vmem:[#allocation5 + $0x60] sm:$0xff] %vm39, %v35
    %53 = vst.msk [vmem:[#allocation5 + $0x68] sm:$0xff] %vm39, %v36
    %54 = vst.msk [vmem:[#allocation5 + $0x70] sm:$0xff] %vm39, %v37
    %55 = vst.msk [vmem:[#allocation5 + $0x78] sm:$0xff] %vm39, %v38
    // Predicated region
    $region10: #{tpu_custom_call.1} parent=1 // pred_check
      _
    $region11: #{tpu_custom_call.1} parent=1 // pred_check_branch
      %57 = sbr.rel (0) target = $region13
    $region12: #{tpu_custom_call.1} parent=1 // pred_region
      %s59 = ssub.s32 2048, 2048
      %60 = vsyncadd [#allocation4], %s59
      %s61 = sshll.u32 [#allocation5], 4
      %s62 = int_to_ptr.vmem [resolvable:$true] %s61
      %67 = dma.vmem_to_hbm [thread:$0]  %s62, 2048, %s1, [#allocation4], 128, 128, 8
    $region13: #{tpu_custom_call.1} parent=1 // pred_fallthru
      _
    // Predicated region
    $region14: #{tpu_custom_call.1} parent=1 // pred_check
      _
    $region15: #{tpu_custom_call.1} parent=1 // pred_check_branch
      %69 = sbr.rel (0) target = $region17
    $region16: #{tpu_custom_call.1} parent=1 // pred_region
      %70 = dma.done [#allocation4], 2048
    $region17: #{tpu_custom_call.1} parent=1 // pred_fallthru
      _
    %71 = vsyncpa [#allocation3], 1
    %72 = vsyncpa [#allocation4], 1

</llo_original>
